<compile_context>
chip_gen: v6e
topology: v6e:2x2x1
jax: 0.10.0
libtpu: 0.0.40
codegen_flags: <defaults>
</compile_context>

<pallas_src>
import functools

import jax
import jax.numpy as jnp
from jax import lax
from jax.experimental import pallas as pl
from jax.experimental.pallas import tpu as pltpu

# ----- model hyper-params (small, consistent with the module __init__) -----
HIDDEN = 32
MLP_HIDDEN = 4 * HIDDEN          # mlp_size
_INV_SQRT2 = 0.7071067811865476


def _gelu_exact(x):
    # nn.GELU() default (approximate='none'): 0.5 * x * (1 + erf(x / sqrt(2)))
    return 0.5 * x * (1.0 + lax.erf(x * jnp.float32(_INV_SQRT2)))


def ffn_kernel(x_ref, w1_ref, w2_ref, bias_ref, o_ref):
    # x_ref: (ROW_BLK, H) f32 block of flattened rows.
    x = x_ref[...].astype(jnp.float32)

    # Packed biases: [b1 (1, MLP) | b2 (1, H)] — static lane slices.
    b1 = bias_ref[:, :MLP_HIDDEN]                     # (1, MLP)
    b2 = bias_ref[:, MLP_HIDDEN:MLP_HIDDEN + HIDDEN]  # (1, H)

    # fc1: bf16 operands on the MXU, f32 accumulation; bias add in f32 (VPU).
    h = jnp.dot(x.astype(jnp.bfloat16), w1_ref[...],
                preferred_element_type=jnp.float32) + b1          # (ROW_BLK, MLP)

    # exact GELU in f32 (erf goes to the EUP slot).
    h = _gelu_exact(h)

    # Dropout == identity at inference.
    # fc2: bf16 operands, f32 accumulation; bias add in f32.
    y = jnp.dot(h.astype(jnp.bfloat16), w2_ref[...],
                preferred_element_type=jnp.float32) + b2          # (ROW_BLK, H)

    o_ref[...] = y.astype(o_ref.dtype)


def _choose_row_block(n_rows, target=256):
    """Rows per grid step.

    Aim for 128-512 rows (fills MXU sublanes, amortizes per-step overhead),
    but keep >= 2 grid steps whenever possible so the "parallel" grid axis can
    be sharded across both v7x TensorCores.
    """
    half = -(-n_rows // 2)                      # cdiv(n_rows, 2)
    return max(8, min(target, ((half + 7) // 8) * 8))


@functools.partial(jax.jit, static_argnames=())
def feed_forward_block(x, params):
    """x: (..., HIDDEN) float32.  Returns same shape, float32."""
    orig_shape = x.shape
    h = orig_shape[-1]
    assert h == HIDDEN

    # Flatten all leading dims: the block is purely row-wise.
    x2d = x.reshape(-1, h).astype(jnp.float32)
    n_rows = x2d.shape[0]

    row_blk = _choose_row_block(n_rows)
    n_pad = pl.cdiv(n_rows, row_blk) * row_blk
    if n_pad != n_rows:
        x2d = jnp.pad(x2d, ((0, n_pad - n_rows), (0, 0)))

    # Weights pre-cast to bf16 once (MXU-native on v6e/v7x); biases stay f32
    # and are packed into one small input.
    w1 = params["w1"].astype(jnp.bfloat16)                      # (H, MLP)
    w2 = params["w2"].astype(jnp.bfloat16)                      # (MLP, H)
    bias = jnp.concatenate(
        [params["b1"].astype(jnp.float32),
         params["b2"].astype(jnp.float32)], axis=-1)            # (1, MLP + H)

    grid = (n_pad // row_blk,)

    out = pl.pallas_call(
        ffn_kernel,
        out_shape=jax.ShapeDtypeStruct((n_pad, h), jnp.float32),
        grid=grid,
        in_specs=[
            pl.BlockSpec((row_blk, HIDDEN), lambda i: (i, 0)),          # x rows
            pl.BlockSpec((HIDDEN, MLP_HIDDEN), lambda i: (0, 0)),       # W1
            pl.BlockSpec((MLP_HIDDEN, HIDDEN), lambda i: (0, 0)),       # W2
            pl.BlockSpec((1, MLP_HIDDEN + HIDDEN), lambda i: (0, 0)),   # [b1|b2]
        ],
        out_specs=pl.BlockSpec((row_blk, HIDDEN), lambda i: (i, 0)),
        compiler_params=pltpu.CompilerParams(
            dimension_semantics=("parallel",)),
    )(x2d, w1, w2, bias)

    return out[:n_rows].reshape(orig_shape)


# ---------------------- pure-JAX references (for checking) ----------------------
def reference_bf16(x, p):
    """Same math as the kernel: bf16 matmul operands, f32 accumulation."""
    w1 = p["w1"].astype(jnp.bfloat16)
    w2 = p["w2"].astype(jnp.bfloat16)
    h = jnp.dot(x.astype(jnp.bfloat16), w1,
                preferred_element_type=jnp.float32) + p["b1"]
    h = 0.5 * h * (1.0 + lax.erf(h * jnp.float32(_INV_SQRT2)))
    y = jnp.dot(h.astype(jnp.bfloat16), w2,
                preferred_element_type=jnp.float32) + p["b2"]
    return y


def reference_f32(x, p):
    h = x @ p["w1"] + p["b1"]
    h = 0.5 * h * (1.0 + lax.erf(h * jnp.float32(_INV_SQRT2)))
    return h @ p["w2"] + p["b2"]


def init_params(key):
    ks = jax.random.split(key, 4)
    scale = 0.05
    # Linear weights stored pre-transposed as (in, out) so kernel does x @ W.
    return {
        "w1": scale * jax.random.normal(ks[0], (HIDDEN, MLP_HIDDEN), jnp.float32),
        "b1": scale * jax.random.normal(ks[1], (1, MLP_HIDDEN), jnp.float32),
        "w2": scale * jax.random.normal(ks[2], (MLP_HIDDEN, HIDDEN), jnp.float32),
        "b2": scale * jax.random.normal(ks[3], (1, HIDDEN), jnp.float32),
    }


if __name__ == "__main__":
    B, L = 2, 8
    key = jax.random.PRNGKey(0)
    kx, kp = jax.random.split(key)
    x = jax.random.normal(kx, (B, L, HIDDEN), jnp.float32)
    params = init_params(kp)

    out = feed_forward_block(x, params)
    out = jax.block_until_ready(out)
    assert out.shape == (B, L, HIDDEN)

    # Exact-semantics check (kernel uses bf16 matmul operands, f32 accumulate).
    ref_b = reference_bf16(x, params)
    err_b = jnp.max(jnp.abs(out - ref_b))
    assert jnp.allclose(out, ref_b, atol=1e-4, rtol=1e-4), f"bf16-ref err={err_b}"

    # Sanity check vs full-f32 math (loose tolerance for bf16 operand rounding).
    ref_f = reference_f32(x, params)
    err_f = jnp.max(jnp.abs(out - ref_f))
    assert jnp.allclose(out, ref_f, atol=3e-2, rtol=3e-2), f"f32-ref err={err_f}"

    print("KERNEL_OK")
</pallas_src>

<mosaic_0001>
module attributes {stable_mosaic.version = 11 : i64} {
  func.func @ffn_kernel(%arg0: i32, %arg1: memref<8x32xf32, #tpu.memory_space<vmem>>, %arg2: memref<32x128xbf16, #tpu.memory_space<vmem>>, %arg3: memref<128x32xbf16, #tpu.memory_space<vmem>>, %arg4: memref<1x160xf32, #tpu.memory_space<vmem>>, %arg5: memref<8x32xf32, #tpu.memory_space<vmem>>) attributes {dimension_semantics = [#tpu.dimension_semantics<parallel>], iteration_bounds = array<i64: 2>, scalar_prefetch = 0 : i64, scratch_operands = 0 : i64, tpu.core_type = #tpu.core_type<tc>, window_params = [{transform_indices = @transform_0, window_bounds = array<i64: 8, 32>}, {pipeline_mode = #tpu.pipeline_mode<synchronous>, transform_indices = @transform_1, window_bounds = array<i64: 32, 128>}, {pipeline_mode = #tpu.pipeline_mode<synchronous>, transform_indices = @transform_2, window_bounds = array<i64: 128, 32>}, {pipeline_mode = #tpu.pipeline_mode<synchronous>, transform_indices = @transform_3, window_bounds = array<i64: 1, 160>}, {transform_indices = @transform_4, window_bounds = array<i64: 8, 32>}]} {
    %c0 = arith.constant 0 : index
    %c0_0 = arith.constant 0 : index
    %0 = vector.load %arg1[%c0, %c0_0] : memref<8x32xf32, #tpu.memory_space<vmem>>, vector<8x32xf32>
    %c0_1 = arith.constant 0 : index
    %c0_2 = arith.constant 0 : index
    %1 = vector.load %arg4[%c0_1, %c0_2] : memref<1x160xf32, #tpu.memory_space<vmem>>, vector<1x128xf32>
    %c0_3 = arith.constant 0 : index
    %c128 = arith.constant 128 : index
    %2 = vector.load %arg4[%c0_3, %c128] : memref<1x160xf32, #tpu.memory_space<vmem>>, vector<1x32xf32>
    %3 = arith.truncf %0 : vector<8x32xf32> to vector<8x32xbf16>
    %c0_4 = arith.constant 0 : index
    %c0_5 = arith.constant 0 : index
    %4 = vector.load %arg2[%c0_4, %c0_5] : memref<32x128xbf16, #tpu.memory_space<vmem>>, vector<32x128xbf16>
    %cst = arith.constant dense<0.000000e+00> : vector<8x128xf32>
    %5 = tpu.matmul %3, %4, %cst {dimension_numbers = #tpu.dot_dimension_numbers<[1], [0], [0], [1], [0, 0, 1, 1], [], []>} : vector<8x32xbf16>, vector<32x128xbf16>, vector<8x128xf32> -> vector<8x128xf32>
    %6 = vector.broadcast %1 : vector<1x128xf32> to vector<8x128xf32>
    %7 = arith.addf %5, %6 : vector<8x128xf32>
    %cst_6 = arith.constant 5.000000e-01 : f32
    %8 = vector.broadcast %cst_6 : f32 to vector<8x128xf32>
    %9 = arith.mulf %8, %7 : vector<8x128xf32>
    %cst_7 = arith.constant 0.707106769 : f32
    %10 = vector.broadcast %cst_7 : f32 to vector<8x128xf32>
    %11 = arith.mulf %7, %10 : vector<8x128xf32>
    %12 = math.erf %11 : vector<8x128xf32>
    %cst_8 = arith.constant 1.000000e+00 : f32
    %13 = vector.broadcast %cst_8 : f32 to vector<8x128xf32>
    %14 = arith.addf %13, %12 : vector<8x128xf32>
    %15 = arith.mulf %9, %14 : vector<8x128xf32>
    %16 = arith.truncf %15 : vector<8x128xf32> to vector<8x128xbf16>
    %c0_9 = arith.constant 0 : index
    %c0_10 = arith.constant 0 : index
    %17 = vector.load %arg3[%c0_9, %c0_10] : memref<128x32xbf16, #tpu.memory_space<vmem>>, vector<128x32xbf16>
    %cst_11 = arith.constant dense<0.000000e+00> : vector<8x32xf32>
    %18 = tpu.matmul %16, %17, %cst_11 {dimension_numbers = #tpu.dot_dimension_numbers<[1], [0], [0], [1], [0, 0, 1, 1], [], []>} : vector<8x128xbf16>, vector<128x32xbf16>, vector<8x32xf32> -> vector<8x32xf32>
    %19 = vector.broadcast %2 : vector<1x32xf32> to vector<8x32xf32>
    %20 = arith.addf %18, %19 : vector<8x32xf32>
    %c0_12 = arith.constant 0 : index
    %c0_13 = arith.constant 0 : index
    %21 = vector.load %arg5[%c0_12, %c0_13] : memref<8x32xf32, #tpu.memory_space<vmem>>, vector<8x32xf32>
    tpu.vector_store %arg5[%c0_12, %c0_13], %20 {strides = array<i32>} : memref<8x32xf32, #tpu.memory_space<vmem>>, vector<8x32xf32>,
    return
  }
  func.func @transform_0(%arg0: i32) -> (i32, i32) {
    %c0_i32 = arith.constant 0 : i32
    %c0_i32_0 = arith.constant 0 : i32
    return %arg0, %c0_i32 : i32, i32
  }
  func.func @transform_1(%arg0: i32) -> (i32, i32) {
    %c0_i32 = arith.constant 0 : i32
    %c0_i32_0 = arith.constant 0 : i32
    %c0_i32_1 = arith.constant 0 : i32
    return %c0_i32, %c0_i32_0 : i32, i32
  }
  func.func @transform_2(%arg0: i32) -> (i32, i32) {
    %c0_i32 = arith.constant 0 : i32
    %c0_i32_0 = arith.constant 0 : i32
    %c0_i32_1 = arith.constant 0 : i32
    return %c0_i32, %c0_i32_0 : i32, i32
  }
  func.func @transform_3(%arg0: i32) -> (i32, i32) {
    %c0_i32 = arith.constant 0 : i32
    %c0_i32_0 = arith.constant 0 : i32
    %c0_i32_1 = arith.constant 0 : i32
    return %c0_i32, %c0_i32_0 : i32, i32
  }
  func.func @transform_4(%arg0: i32) -> (i32, i32) {
    %c0_i32 = arith.constant 0 : i32
    %c0_i32_0 = arith.constant 0 : i32
    return %arg0, %c0_i32 : i32, i32
  }
}

</mosaic_0001>

<llo_original>
// kernel: feed_forward_block.1
$region0: #{feed_forward_block.1}
  #allocation0 [shape = 'u32[]', space=smem, size = 0x4, offset = 0x4, fixed_abs, tag = 'smem constant byte address 0x4 - core index']
  #allocation1 [shape = 'u32[144,128]{1,0:T(1,128)}', space=vmem, size = 0x12000, scoped, tag = 'internal scratch']
  %s0 = inlined_call_operand.vmem [shape: f32[16,32], index: 0, kind: input, shape index: {}]
  %s1 = inlined_call_operand.vmem [shape: bf16[32,128], index: 1, kind: input, shape index: {}]
  %s2 = inlined_call_operand.vmem [shape: bf16[128,32], index: 2, kind: input, shape index: {}]
  %s3 = inlined_call_operand.vmem [shape: f32[1,160], index: 3, kind: input, shape index: {}]
  %s4 = inlined_call_operand.hbm [shape: f32[16,32], index: 4, kind: output, shape index: {}]
  %s5 = sld [smem:[#allocation0]]
  $region49: #{feed_forward_block.1} parent=0
    _
  %s7 = ssub.s32 1, %s5
  %s8 = scalar_select 0, %s7, %s5
  $region1: #{feed_forward_block.1} parent=0
    #allocation2 [shape = 'u8[8192]{0}', space=vmem, size = 0x2000, scoped, tag = 'output window, operand 0']
    #allocation3 [shape = 's32[2]{0}', space=sflag, size = 0x8, scoped, tag = 'scoped memory for feed_forward_block.1']
    %9 = vsyncpa [#allocation3], 0
    %s10 = scalar_lea.sflag [#allocation3], 1
    %11 = vsyncpa %s10, 0
    loop: start=0, step=1, limit=4
    $region2: #{feed_forward_block.1} parent=1 // loop_pre_header
      _
    $region3: #{feed_forward_block.1} parent=1 // loop_header
      %s13 = sphi 0, %s17
      %p14 = scmp.ge.s32.totalorder %s13, 4
      %s23 = sphi 0, %s25
      %s26 = sphi 0, %s23
      %s27 = sphi 0, %s26
      %s43 = sphi 0, %s27
      %s47 = sphi 0, %s47
      %s49 = sphi 0, %s47
      %s50 = sphi 0, %s49
      %s64 = sphi 0, %s50
      %s68 = sphi 0, %s68
      %s70 = sphi 0, %s68
      %s71 = sphi 0, %s70
      %s85 = sphi 0, %s71
      %s89 = sphi 0, %s89
      %s91 = sphi 0, %s89
      %s92 = sphi 0, %s91
      %s106 = sphi 0, %s92
      %s112 = sphi 0, %s114
      %s115 = sphi 0, %s112
      %s116 = sphi 0, %s115
      %s132 = sphi 0, %s116
    $region4: #{feed_forward_block.1} parent=1 // loop_header_branch
      %16 = sbr.rel (%p14) target = $region8
    $region5: #{feed_forward_block.1} parent=1 // loop_body
      %s18 = ssub.s32 %s13, 1
      %s19 = ssub.s32 %s13, 2
      %s20 = sadd.s32 %s13, 1
      %s21 = ssub.s32 %s13, %s20
      %p22 = scmp.eq.s32.totalorder %s21, 0
      %s24 = sadd.s32 %s23, 1
      %s25 = scalar_select %p22, %s23, %s24
      %p28 = pneg %p22
      %p29 = scmp.eq.s32.totalorder %s13, 1
      %p30 = por %p28, %p29
      %p31 = scmp.ne.s32.totalorder %s23, %s26
      %p32 = scmp.eq.s32.totalorder %s13, 0
      %p33 = por %p31, %p32
      %p34 = scmp.ne.s32.totalorder %s23, %s26
      %p35 = scmp.eq.s32.totalorder %s18, 1
      %p36 = por %p34, %p35
      %p37 = scmp.ne.s32.totalorder %s26, %s27
      %p38 = scmp.eq.s32.totalorder %s18, 0
      %p39 = por %p37, %p38
      %p40 = scmp.ne.s32.totalorder %s26, %s27
      %p41 = scmp.eq.s32.totalorder %s19, 1
      %p42 = por %p40, %p41
      %p44 = scmp.ne.s32.totalorder %s27, %s43
      %p45 = scmp.eq.s32.totalorder %s19, 0
      %p46 = por %p44, %p45
      %s48 = sadd.s32 %s47, 1
      %p51 = scmp.eq.s32.totalorder %s13, 1
      %p52 = scmp.ne.s32.totalorder %s47, %s49
      %p53 = scmp.eq.s32.totalorder %s13, 0
      %p54 = por %p52, %p53
      %p55 = scmp.ne.s32.totalorder %s47, %s49
      %p56 = scmp.eq.s32.totalorder %s18, 1
      %p57 = por %p55, %p56
      %p58 = scmp.ne.s32.totalorder %s49, %s50
      %p59 = scmp.eq.s32.totalorder %s18, 0
      %p60 = por %p58, %p59
      %p61 = scmp.ne.s32.totalorder %s49, %s50
      %p62 = scmp.eq.s32.totalorder %s19, 1
      %p63 = por %p61, %p62
      %p65 = scmp.ne.s32.totalorder %s50, %s64
      %p66 = scmp.eq.s32.totalorder %s19, 0
      %p67 = por %p65, %p66
      %s69 = sadd.s32 %s68, 1
      %p72 = scmp.eq.s32.totalorder %s13, 1
      %p73 = scmp.ne.s32.totalorder %s68, %s70
      %p74 = scmp.eq.s32.totalorder %s13, 0
      %p75 = por %p73, %p74
      %p76 = scmp.ne.s32.totalorder %s68, %s70
      %p77 = scmp.eq.s32.totalorder %s18, 1
      %p78 = por %p76, %p77
      %p79 = scmp.ne.s32.totalorder %s70, %s71
      %p80 = scmp.eq.s32.totalorder %s18, 0
      %p81 = por %p79, %p80
      %p82 = scmp.ne.s32.totalorder %s70, %s71
      %p83 = scmp.eq.s32.totalorder %s19, 1
      %p84 = por %p82, %p83
      %p86 = scmp.ne.s32.totalorder %s71, %s85
      %p87 = scmp.eq.s32.totalorder %s19, 0
      %p88 = por %p86, %p87
      %s90 = sadd.s32 %s89, 1
      %p93 = scmp.eq.s32.totalorder %s13, 1
      %p94 = scmp.ne.s32.totalorder %s89, %s91
      %p95 = scmp.eq.s32.totalorder %s13, 0
      %p96 = por %p94, %p95
      %p97 = scmp.ne.s32.totalorder %s89, %s91
      %p98 = scmp.eq.s32.totalorder %s18, 1
      %p99 = por %p97, %p98
      %p100 = scmp.ne.s32.totalorder %s91, %s92
      %p101 = scmp.eq.s32.totalorder %s18, 0
      %p102 = por %p100, %p101
      %p103 = scmp.ne.s32.totalorder %s91, %s92
      %p104 = scmp.eq.s32.totalorder %s19, 1
      %p105 = por %p103, %p104
      %p107 = scmp.ne.s32.totalorder %s92, %s106
      %p108 = scmp.eq.s32.totalorder %s19, 0
      %p109 = por %p107, %p108
      %s110 = ssub.s32 %s13, %s20
      %p111 = scmp.eq.s32.totalorder %s110, 0
      %s113 = sadd.s32 %s112, 1
      %s114 = scalar_select %p111, %s112, %s113
      %p117 = pneg %p111
      %p118 = scmp.eq.s32.totalorder %s13, 1
      %p119 = por %p117, %p118
      %p120 = scmp.ne.s32.totalorder %s112, %s115
      %p121 = scmp.eq.s32.totalorder %s13, 0
      %p122 = por %p120, %p121
      %p123 = scmp.ne.s32.totalorder %s112, %s115
      %p124 = scmp.eq.s32.totalorder %s18, 1
      %p125 = por %p123, %p124
      %p126 = scmp.ne.s32.totalorder %s115, %s116
      %p127 = scmp.eq.s32.totalorder %s18, 0
      %p128 = por %p126, %p127
      %p129 = scmp.ne.s32.totalorder %s115, %s116
      %p130 = scmp.eq.s32.totalorder %s19, 1
      %p131 = por %p129, %p130
      %p133 = scmp.ne.s32.totalorder %s116, %s132
      %p134 = scmp.eq.s32.totalorder %s19, 0
      %p135 = por %p133, %p134
      %p136 = scmp.le.s32.totalorder 1, %s13
      %p137 = scmp.lt.s32.totalorder %s13, 3
      %p138 = pnand %p136, %p137
      %p139 = pneg %p138
      // Predicated region
      $region9: #{feed_forward_block.1} parent=5 // pred_check
        _
      $region10: #{feed_forward_block.1} parent=5 // pred_check_branch
        %141 = sbr.rel (%p138) target = $region12
      $region11: #{feed_forward_block.1} parent=5 // pred_region
        %s142 = ssub.s32 %s13, 1
        // Predicated region
        $region13: #{feed_forward_block.1} parent=11 // pred_check
          %p143 = pneg %p60
        $region14: #{feed_forward_block.1} parent=11 // pred_check_branch
          %145 = sbr.rel (%p143) target = $region16
        $region15: #{feed_forward_block.1} parent=11 // pred_region
          _
        $region16: #{feed_forward_block.1} parent=11 // pred_fallthru
          _
        // Predicated region
        $region17: #{feed_forward_block.1} parent=11 // pred_check
          %p146 = pneg %p81
        $region18: #{feed_forward_block.1} parent=11 // pred_check_branch
          %148 = sbr.rel (%p146) target = $region20
        $region19: #{feed_forward_block.1} parent=11 // pred_region
          _
        $region20: #{feed_forward_block.1} parent=11 // pred_fallthru
          _
        // Predicated region
        $region21: #{feed_forward_block.1} parent=11 // pred_check
          %p149 = pneg %p102
        $region22: #{feed_forward_block.1} parent=11 // pred_check_branch
          %151 = sbr.rel (%p149) target = $region24
        $region23: #{feed_forward_block.1} parent=11 // pred_region
          _
        $region24: #{feed_forward_block.1} parent=11 // pred_fallthru
          _
      $region12: #{feed_forward_block.1} parent=5 // pred_fallthru
        _
      %p152 = scmp.lt.s32.totalorder %s13, 2
      // Predicated region
      $region25: #{feed_forward_block.1} parent=5 // pred_check
        %p153 = pneg %p152
      $region26: #{feed_forward_block.1} parent=5 // pred_check_branch
        %155 = sbr.rel (%p153) target = $region28
      $region27: #{feed_forward_block.1} parent=5 // pred_region
        // Predicated region
        $region29: #{feed_forward_block.1} parent=27 // pred_check
          %p156 = pneg %p33
        $region30: #{feed_forward_block.1} parent=27 // pred_check_branch
          %158 = sbr.rel (%p156) target = $region32
        $region31: #{feed_forward_block.1} parent=27 // pred_region
          %p159 = scmp.lt.s32.totalorder %s13, 1
          %s160 = scalar_select %p159, %s13, 1
          %s161 = smul.addr %s160, 8
          %s162 = scalar_lea.vmem %s0, %s161
        $region32: #{feed_forward_block.1} parent=27 // pred_fallthru
          _
      $region28: #{feed_forward_block.1} parent=5 // pred_fallthru
        _
      %p163 = scmp.le.s32.totalorder 1, %s13
      %p164 = scmp.lt.s32.totalorder %s13, 3
      %p165 = pnand %p163, %p164
      %p166 = pneg %p165
      // Predicated region
      $region33: #{feed_forward_block.1} parent=5 // pred_check
        _
      $region34: #{feed_forward_block.1} parent=5 // pred_check_branch
        %168 = sbr.rel (%p165) target = $region36
      $region35: #{feed_forward_block.1} parent=5 // pred_region
        %s169 = ssub.s32 %s13, 1
        %p170 = scmp.lt.s32.totalorder %s18, 1
        %s171 = scalar_select %p170, %s18, 1
        %s172 = smul.addr %s171, 8
        %s173 = scalar_lea.vmem %s0, %s172
        %p174 = pneg %p39
        %p175 = pneg %p36
        %p176 = pneg %p60
        %p177 = pneg %p57
        %p178 = pneg %p81
        %p179 = pneg %p78
        %p180 = pneg %p102
        %p181 = pneg %p99
        %p182 = pneg %p128
        %p183 = pneg %p125
        %s184 = sand.u32 %s115, 1
        %s185 = scalar_lea.sflag [#allocation3], %s184
        %s186 = sand.u32 %s115, 1
        %s187 = smul.addr %s186, 8
        %s188 = scalar_lea.vmem [#allocation2], %s187
        %p189 = scmp.lt.s32.totalorder %s18, 1
        %s190 = scalar_select %p189, %s18, 1
        %s191 = smul.addr %s190, 8
        %s192 = scalar_lea.vmem %s0, %s191
        %v194 = vld [vmem:[%s192] sm:$0xff]
        %v195 = vld [vmem:[%s3] sm:$0x1]
        %v196 = vld [vmem:[%s3 + $0x1] sm:$0x1]
        %v197 = vpack.c.bf16 %v194, %v194
        %v198 = vld [vmem:[%s1] sm:$0xf]
        %v199 = vld [vmem:[%s1 + $0x4] sm:$0xf]
        %v200 = vld [vmem:[%s1 + $0x8] sm:$0xf]
        %v201 = vld [vmem:[%s1 + $0xc] sm:$0xf]
        %v203 = vlaneseq
        %v204 = vshrl.u32 %v203, 7
        %v205 = vsub.s32 0, %v204
        %v206 = vrot.slane %v195, %v205
        %v212 = vunpack.c.l.b16 %v198
        %v213 = vunpack.c.l.b16 %v199
        %v214 = vunpack.c.l.b16 %v200
        %v215 = vunpack.c.l.b16 %v201
        %v216 = vpack.c.b16 %v213, %v212
        %v217 = vpack.c.b16 %v215, %v214
        %vm220 = vcmask 261120
        %v222 = vsel %vm220, %v197, 0
        %224 = vmatprep.subr.bf16.mxu0 0
        %225 = vmatpush1.bf16.msra.mxu0 0
        %226 = vmatprep.subr.bf16.mxu0 0
        %227 = vmatpush1.bf16.msra.mxu0 0
        %228 = vmatprep.subr.bf16.mxu0 0
        %229 = vmatpush1.bf16.msra.mxu0 0
        %230 = vmatprep.subr.bf16.mxu0 0
        %231 = vmatpush1.bf16.msra.mxu0 0
        %232 = vmatprep.subr.bf16.mxu0 0
        %233 = vmatpush1.bf16.msra.mxu0 0
        %234 = vmatprep.subr.bf16.mxu0 0
        %235 = vmatpush1.bf16.msra.mxu0 0
        %236 = vmatprep.subr.bf16.mxu0 0
        %237 = vmatpush1.bf16.msra.mxu0 %v217
        %238 = vmatprep.subr.bf16.mxu0 0
        %239 = vmatpush1.bf16.msra.mxu0 %v216
        %240 = vmatprep.subr.bf16.mxu0 0
        %241 = vmatpush2.bf16.msra.mxu0 0
        %242 = vmatprep.subr.bf16.mxu0 0
        %243 = vmatpush2.bf16.msra.mxu0 0
        %244 = vmatprep.subr.bf16.mxu0 0
        %245 = vmatpush2.bf16.msra.mxu0 0
        %246 = vmatprep.subr.bf16.mxu0 0
        %247 = vmatpush2.bf16.msra.mxu0 0
        %248 = vmatprep.subr.bf16.mxu0 0
        %249 = vmatpush2.bf16.msra.mxu0 0
        %250 = vmatprep.subr.bf16.mxu0 0
        %251 = vmatpush2.bf16.msra.mxu0 0
        %252 = vmatprep.subr.bf16.mxu0 0
        %253 = vmatpush2.bf16.msra.mxu0 0
        %254 = vmatprep.subr.bf16.mxu0 0
        %255 = vmatpush2.bf16.msra.mxu0 0
        %256 = vmatprep.mubr.bf16.mxu0 0
        %257 = vmatmul.mubr.bf16.gmra.mxu0 %v222
        %v258 = vpop.f32.mrf.mxu0
        %v259 = vadd.f32 %v206, %v258
        %v260 = vpop.f32.mrf.mxu0
        %v261 = vpop.f32.mrf.mxu0
        %v262 = vpop.f32.mrf.mxu0
        %263 = vdwg.mxu0
        %v264 = vmul.f32 %v259, 0.5
        %v265 = vmul.f32 %v259, 0.70710677
        %v266 = verf.f32.pop %v265
        %v267 = vadd.f32 %v266, 1.0
        %v268 = vmul.f32 %v264, %v267
        %v269 = vpack.c.bf16 %v268, %v268
        %v270 = vld [vmem:[%s2] sm:$0xf]
        %v271 = vld [vmem:[%s2 + $0x4] sm:$0xf]
        %v272 = vld [vmem:[%s2 + $0x8] sm:$0xf]
        %v273 = vld [vmem:[%s2 + $0xc] sm:$0xf]
        %v274 = vld [vmem:[%s2 + $0x10] sm:$0xf]
        %v275 = vld [vmem:[%s2 + $0x14] sm:$0xf]
        %v276 = vld [vmem:[%s2 + $0x18] sm:$0xf]
        %v277 = vld [vmem:[%s2 + $0x1c] sm:$0xf]
        %v278 = vld [vmem:[%s2 + $0x20] sm:$0xf]
        %v279 = vld [vmem:[%s2 + $0x24] sm:$0xf]
        %v280 = vld [vmem:[%s2 + $0x28] sm:$0xf]
        %v281 = vld [vmem:[%s2 + $0x2c] sm:$0xf]
        %v282 = vld [vmem:[%s2 + $0x30] sm:$0xf]
        %v283 = vld [vmem:[%s2 + $0x34] sm:$0xf]
        %v284 = vld [vmem:[%s2 + $0x38] sm:$0xf]
        %v285 = vld [vmem:[%s2 + $0x3c] sm:$0xf]
        %v287 = vlaneseq
        %v288 = vshrl.u32 %v287, 7
        %v289 = vsub.s32 0, %v288
        %v290 = vrot.slane %v196, %v289
        %v308 = vunpack.c.l.b16 %v270
        %v309 = vunpack.c.l.b16 %v271
        %v310 = vunpack.c.l.b16 %v272
        %v311 = vunpack.c.l.b16 %v273
        %v312 = vunpack.c.l.b16 %v274
        %v313 = vunpack.c.l.b16 %v275
        %v314 = vunpack.c.l.b16 %v276
        %v315 = vunpack.c.l.b16 %v277
        %v316 = vunpack.c.l.b16 %v278
        %v317 = vunpack.c.l.b16 %v279
        %v318 = vunpack.c.l.b16 %v280
        %v319 = vunpack.c.l.b16 %v281
        %v320 = vunpack.c.l.b16 %v282
        %v321 = vunpack.c.l.b16 %v283
        %v322 = vunpack.c.l.b16 %v284
        %v323 = vunpack.c.l.b16 %v285
        %v324 = vpack.c.b16 %v309, %v308
        %v325 = vpack.c.b16 %v311, %v310
        %v326 = vpack.c.b16 %v313, %v312
        %v327 = vpack.c.b16 %v315, %v314
        %v328 = vpack.c.b16 %v317, %v316
        %v329 = vpack.c.b16 %v319, %v318
        %v330 = vpack.c.b16 %v321, %v320
        %v331 = vpack.c.b16 %v323, %v322
        %340 = vmatprep.subr.bf16.mxu0 0
        %341 = vmatpush1.bf16.msra.mxu0 %v331
        %342 = vmatprep.subr.bf16.mxu0 0
        %343 = vmatpush1.bf16.msra.mxu0 %v330
        %344 = vmatprep.subr.bf16.mxu0 0
        %345 = vmatpush1.bf16.msra.mxu0 %v329
        %346 = vmatprep.subr.bf16.mxu0 0
        %347 = vmatpush1.bf16.msra.mxu0 %v328
        %348 = vmatprep.subr.bf16.mxu0 0
        %349 = vmatpush1.bf16.msra.mxu0 %v327
        %350 = vmatprep.subr.bf16.mxu0 0
        %351 = vmatpush1.bf16.msra.mxu0 %v326
        %352 = vmatprep.subr.bf16.mxu0 0
        %353 = vmatpush1.bf16.msra.mxu0 %v325
        %354 = vmatprep.subr.bf16.mxu0 0
        %355 = vmatpush1.bf16.msra.mxu0 %v324
        %356 = vmatprep.subr.bf16.mxu0 0
        %357 = vmatpush2.bf16.msra.mxu0 0
        %358 = vmatprep.subr.bf16.mxu0 0
        %359 = vmatpush2.bf16.msra.mxu0 0
        %360 = vmatprep.subr.bf16.mxu0 0
        %361 = vmatpush2.bf16.msra.mxu0 0
        %362 = vmatprep.subr.bf16.mxu0 0
        %363 = vmatpush2.bf16.msra.mxu0 0
        %364 = vmatprep.subr.bf16.mxu0 0
        %365 = vmatpush2.bf16.msra.mxu0 0
        %366 = vmatprep.subr.bf16.mxu0 0
        %367 = vmatpush2.bf16.msra.mxu0 0
        %368 = vmatprep.subr.bf16.mxu0 0
        %369 = vmatpush2.bf16.msra.mxu0 0
        %370 = vmatprep.subr.bf16.mxu0 0
        %371 = vmatpush2.bf16.msra.mxu0 0
        %372 = vmatprep.mubr.bf16.mxu0 0
        %373 = vmatmul.mubr.bf16.gmra.mxu0 %v269
        %v374 = vpop.f32.mrf.mxu0
        %v375 = vadd.f32 %v290, %v374
        %v376 = vpop.f32.mrf.mxu0
        %v377 = vpop.f32.mrf.mxu0
        %v378 = vpop.f32.mrf.mxu0
        %379 = vdwg.mxu0
        %380 = vst.msk [vmem:[%s188] sm:$0xff] %vm220, %v375
        %s381 = sand.u32 %s115, 1
        %s382 = scalar_lea.sflag [#allocation3], %s381
        %s383 = sand.u32 %s115, 1
        %s384 = smul.addr %s383, 8
        %s385 = scalar_lea.vmem [#allocation2], %s384
        // Predicated region
        $region37: #{feed_forward_block.1} parent=35 // pred_check
          %p386 = pneg %p125
        $region38: #{feed_forward_block.1} parent=35 // pred_check_branch
          %388 = sbr.rel (%p386) target = $region40
        $region39: #{feed_forward_block.1} parent=35 // pred_region
          %s390 = ssub.s32 128, 128
          %391 = vsyncadd %s382, %s390
          %s392 = smul.addr %s18, 128
          %s393 = scalar_lea.hbm %s4, %s392
          %s395 = sshll.u32 %s385, 4
          %s396 = int_to_ptr.vmem [resolvable:$true] %s395
          %398 = dma.vmem_to_hbm [thread:$0]  %s396, 128, %s393, %s382
        $region40: #{feed_forward_block.1} parent=35 // pred_fallthru
          _
      $region36: #{feed_forward_block.1} parent=5 // pred_fallthru
        _
      %p399 = scmp.le.s32.totalorder 2, %s13
      // Predicated region
      $region41: #{feed_forward_block.1} parent=5 // pred_check
        %p400 = pneg %p399
      $region42: #{feed_forward_block.1} parent=5 // pred_check_branch
        %402 = sbr.rel (%p400) target = $region44
      $region43: #{feed_forward_block.1} parent=5 // pred_region
        %s403 = ssub.s32 %s13, 2
        // Predicated region
        $region45: #{feed_forward_block.1} parent=43 // pred_check
          %p404 = pneg %p131
        $region46: #{feed_forward_block.1} parent=43 // pred_check_branch
          %406 = sbr.rel (%p404) target = $region48
        $region47: #{feed_forward_block.1} parent=43 // pred_region
          %s407 = sand.u32 %s116, 1
          %s408 = scalar_lea.sflag [#allocation3], %s407
          %s409 = sand.u32 %s116, 1
          %s410 = smul.addr %s409, 8
          %s411 = scalar_lea.vmem [#allocation2], %s410
          %412 = dma.done %s408, 128
        $region48: #{feed_forward_block.1} parent=43 // pred_fallthru
          _
      $region44: #{feed_forward_block.1} parent=5 // pred_fallthru
        _
    $region6: #{feed_forward_block.1} parent=1 // loop_footer
      %s17 = sadd.s32 1, %s13
    $region7: #{feed_forward_block.1} parent=1 // loop_footer_branch
      %12 = sbr.rel target = $region3
    $region8: #{feed_forward_block.1} parent=1 // loop_exit
      _
    %413 = vsyncpa [#allocation3], 1
    %s414 = scalar_lea.sflag [#allocation3], 1
    %415 = vsyncpa %s414, 1

</llo_original>
